<compile_context>
chip_gen: v6e
topology: v6e:2x2x1
jax: 0.10.0
libtpu: 0.0.40
codegen_flags: <defaults>
</compile_context>

<pallas_src>
import math

import jax
import jax.numpy as jnp
from jax.experimental import pallas as pl
from jax.experimental.pallas import tpu as pltpu


def _round_up(x, m):
    return ((x + m - 1) // m) * m


# ---------------------------------------------------------------------------
# Tiled linear kernel:  out = x @ wT + b     (wT pre-transposed: [Hin, Hout])
# ---------------------------------------------------------------------------
def _linear_kernel(x_ref, w_ref, b_ref, o_ref, acc_ref):
    @pl.when(pl.program_id(2) == 0)
    def _():
        acc_ref[...] = jnp.zeros_like(acc_ref)

    acc_ref[...] += jnp.dot(x_ref[...], w_ref[...],
                            preferred_element_type=jnp.float32)

    @pl.when(pl.program_id(2) == pl.num_programs(2) - 1)
    def _():
        o_ref[...] = (acc_ref[...] + b_ref[...]).astype(o_ref.dtype)


def _pick_weight_tile(dim, target):
    """Largest 128-multiple tile <= target that divides dim, else the full dim."""
    if dim <= target:
        return dim
    t = (target // 128) * 128
    while t >= 128:
        if dim % t == 0:
            return t
        t -= 128
    # TODO(synk): dims > target that are not 128-multiples fall back to one
    # full-dim block; pad + mask instead if such weight shapes ever appear.
    return dim


def pallas_linear(x2d, wT, b, *, out_dtype=None,
                  tm_target=256, tn_target=512, tk_target=512):
    """x2d: [M, Hin]; wT: [Hin, Hout]; b: [Hout] (f32). Returns [M, Hout]."""
    M, Hin = x2d.shape
    Hout = wT.shape[1]
    out_dtype = x2d.dtype if out_dtype is None else out_dtype

    # Keep a large, aligned M tile; pad the rows instead of shrinking the tile.
    tm = tm_target if M >= tm_target else _round_up(M, 8)
    M_pad = _round_up(M, tm)
    if M_pad != M:
        x2d = jnp.pad(x2d, ((0, M_pad - M), (0, 0)))
    tn = _pick_weight_tile(Hout, tn_target)
    tk = _pick_weight_tile(Hin, tk_target)

    out = pl.pallas_call(
        _linear_kernel,
        out_shape=jax.ShapeDtypeStruct((M_pad, Hout), out_dtype),
        grid_spec=pltpu.PrefetchScalarGridSpec(
            num_scalar_prefetch=0,
            grid=(M_pad // tm, Hout // tn, Hin // tk),
            in_specs=[
                pl.BlockSpec((tm, tk), lambda i, j, k: (i, k)),
                pl.BlockSpec((tk, tn), lambda i, j, k: (k, j)),
                pl.BlockSpec((1, tn), lambda i, j, k: (0, j)),
            ],
            out_specs=pl.BlockSpec((tm, tn), lambda i, j, k: (i, j)),
            scratch_shapes=[pltpu.VMEM((tm, tn), jnp.float32)],
        ),
        compiler_params=pltpu.CompilerParams(
            dimension_semantics=("parallel", "parallel", "arbitrary")),
    )(x2d, wT, b.reshape(1, Hout).astype(jnp.float32))
    return out[:M] if M_pad != M else out


# ---------------------------------------------------------------------------
# Fused ConsMax attention + output projection kernel
#   grid = (B, S//tq); blocks: q (1,tq,H), kv (1,S,2H), wo_T (H,H), bo (1,H)
# ---------------------------------------------------------------------------
def _make_attn_kernel(num_heads, head_dim, has_mask):
    N, Dh = num_heads, head_dim
    H = N * Dh

    def body(q_ref, kv_ref, bias_ref, wo_ref, bo_ref, o_ref):
        tq = q_ref.shape[1]
        S = kv_ref.shape[1]

        q3 = q_ref[0].reshape(tq, N, Dh)              # [tq, N, Dh]
        kv = kv_ref[0]                                # [S, 2H]
        k3 = kv[:, :H].reshape(S, N, Dh)              # [S, N, Dh]
        v3 = kv[:, H:].reshape(S, N, Dh)              # [S, N, Dh]

        # Head-batched scores [N, tq, S]; 1/sqrt(Dh) pre-folded into the Q weights.
        s = jnp.einsum("qnd,knd->nqk", q3, k3,
                       preferred_element_type=jnp.float32)
        if has_mask:
            # One broadcast, reused by every head and query row.
            s = s + bias_ref[0].astype(jnp.float32)[None]        # [1, 1, S]

        # ConsMax: exp(s - rowmax).  The beta shift cancels exactly against the
        # row max; 1/gamma is folded into the output-projection weights.
        m = jnp.max(s, axis=-1, keepdims=True)
        p = jnp.exp(s - m).astype(v3.dtype)                       # [N, tq, S]

        ctx = jnp.einsum("nqk,knd->nqd", p, v3,
                         preferred_element_type=jnp.float32)      # [N, tq, Dh]

        # Fused output projection (ctx never leaves VMEM): [tq, H] @ [H, H] + bo.
        ctx2 = jnp.swapaxes(ctx, 0, 1).reshape(tq, H).astype(wo_ref.dtype)
        out = jnp.dot(ctx2, wo_ref[...], preferred_element_type=jnp.float32)
        o_ref[0] = (out + bo_ref[...]).astype(o_ref.dtype)        # lane-dense store

    if has_mask:
        def kernel(q_ref, kv_ref, bias_ref, wo_ref, bo_ref, o_ref):
            body(q_ref, kv_ref, bias_ref, wo_ref, bo_ref, o_ref)
    else:
        def kernel(q_ref, kv_ref, wo_ref, bo_ref, o_ref):
            body(q_ref, kv_ref, None, wo_ref, bo_ref, o_ref)
    return kernel


def pallas_consmax_attention_output(q, kv, mask_bias, wo_T, bo,
                                    num_heads, head_dim, *,
                                    out_dtype, tq_target=256):
    """q: [B,S,H]; kv: [B,S,2H]; mask_bias: [B,1,S] or None; wo_T: [H,H]; bo: [1,H]."""
    B, S, H = q.shape
    tq = min(tq_target, _round_up(S, 8))
    S_pad = _round_up(S, tq)
    if S_pad != S:
        # Only query rows are padded (keys/values stay at S); padded rows are
        # finite garbage and sliced off below.
        q = jnp.pad(q, ((0, 0), (0, S_pad - S), (0, 0)))
    n_q = S_pad // tq

    has_mask = mask_bias is not None
    kernel = _make_attn_kernel(num_heads, head_dim, has_mask)

    in_specs = [
        pl.BlockSpec((1, tq, H), lambda b, i: (b, i, 0)),
        pl.BlockSpec((1, S, 2 * H), lambda b, i: (b, 0, 0)),   # revisited across q-tiles
    ]
    inputs = [q, kv]
    if has_mask:
        in_specs.append(pl.BlockSpec((1, 1, S), lambda b, i: (b, 0, 0)))
        inputs.append(mask_bias)
    in_specs += [
        pl.BlockSpec((H, H), lambda b, i: (0, 0)),             # wo_T (cached)
        pl.BlockSpec((1, H), lambda b, i: (0, 0)),             # bo   (cached)
    ]
    inputs += [wo_T, bo]

    out = pl.pallas_call(
        kernel,
        out_shape=jax.ShapeDtypeStruct((B, S_pad, H), out_dtype),
        grid_spec=pltpu.PrefetchScalarGridSpec(
            num_scalar_prefetch=0,
            grid=(B, n_q),
            in_specs=in_specs,
            out_specs=pl.BlockSpec((1, tq, H), lambda b, i: (b, i, 0)),
        ),
        compiler_params=pltpu.CompilerParams(
            dimension_semantics=("parallel", "parallel")),
    )(*inputs)
    return out if S_pad == S else out[:, :S, :]


# ---------------------------------------------------------------------------
# Parameter prep (one-time): fold 1/sqrt(Dh) into Q weights, fold 1/gamma into
# the output projection, fuse K/V weights, pre-transpose everything.
# ---------------------------------------------------------------------------
def prepare_params(raw, compute_dtype=jnp.float32):
    N = raw["num_heads"]
    H = raw["wq"].shape[0]
    Dh = H // N
    scale = 1.0 / math.sqrt(Dh)

    wq_T = (jnp.transpose(raw["wq"]) * scale).astype(compute_dtype)            # [H, H]
    bq = (raw["bq"] * scale).astype(jnp.float32)
    wkv = jnp.concatenate([raw["wk"], raw["wv"]], axis=0)                      # [2H, H]
    bkv = jnp.concatenate([raw["bk"], raw["bv"]], axis=0).astype(jnp.float32)  # [2H]
    wo_T = (jnp.transpose(raw["wo"]) / raw["gamma"][0]).astype(compute_dtype)  # [H, H]

    return {
        "num_heads": N,
        "head_dim": Dh,
        "compute_dtype": compute_dtype,
        "wq_T": wq_T, "bq": bq,
        "wkv_T": jnp.transpose(wkv).astype(compute_dtype),                     # [H, 2H]
        "bkv": bkv,
        "wo_T": wo_T,
        "bo": raw["bo"].reshape(1, H).astype(jnp.float32),
        # beta deliberately unused: it cancels exactly against the row max.
    }


# ---------------------------------------------------------------------------
# Full module forward
# ---------------------------------------------------------------------------
def consmax_attention_forward(prepped, hidden_states, attention_mask=None, *,
                              tq_target=256):
    B, S, H = hidden_states.shape
    cdt = prepped["compute_dtype"]

    x2d = hidden_states.reshape(B * S, H).astype(cdt)
    q = pallas_linear(x2d, prepped["wq_T"], prepped["bq"], out_dtype=cdt)
    kv = pallas_linear(x2d, prepped["wkv_T"], prepped["bkv"], out_dtype=cdt)
    q = q.reshape(B, S, H)
    kv = kv.reshape(B, S, 2 * H)

    if attention_mask is None:
        mask_bias = None                              # statically skip mask math
    else:
        mask_bias = ((1.0 - attention_mask.astype(jnp.float32)) * -10000.0
                     ).reshape(B, 1, S)

    return pallas_consmax_attention_output(
        q, kv, mask_bias, prepped["wo_T"], prepped["bo"],
        prepped["num_heads"], prepped["head_dim"],
        out_dtype=hidden_states.dtype, tq_target=tq_target)


# ---------------------------------------------------------------------------
# Pure-JAX reference (mirrors the PyTorch forward exactly; eval-mode dropout)
# ---------------------------------------------------------------------------
def reference_forward(raw, hidden_states, attention_mask=None):
    B, S, H = hidden_states.shape
    N = raw["num_heads"]
    Dh = H // N

    def lin(x, w, b):
        return x @ w.T + b

    q = lin(hidden_states, raw["wq"], raw["bq"])
    k = lin(hidden_states, raw["wk"], raw["bk"])
    v = lin(hidden_states, raw["wv"], raw["bv"])

    def to_heads(t):
        return t.reshape(B, S, N, Dh).transpose(0, 2, 1, 3)

    qh, kh, vh = to_heads(q), to_heads(k), to_heads(v)
    scores = jnp.einsum("bnqd,bnkd->bnqk", qh, kh) / math.sqrt(Dh)
    if attention_mask is not None:
        m = attention_mask[:, None, None, :].astype(jnp.float32)
        scores = scores + (1.0 - m) * -10000.0
    shifted = scores - raw["beta"][0]
    mx = jnp.max(shifted, axis=-1, keepdims=True)
    probs = jnp.exp(shifted - mx) / raw["gamma"][0]
    ctx = jnp.einsum("bnqk,bnkd->bnqd", probs, vh)
    ctx = ctx.transpose(0, 2, 1, 3).reshape(B, S, H)
    return lin(ctx, raw["wo"], raw["bo"])


# ---------------------------------------------------------------------------
if __name__ == "__main__":
    # Config: hidden_size=32, num_attention_heads=4 -> head_size=8; B=2, S=8.
    B, S, H, N = 2, 8, 32, 4

    key = jax.random.PRNGKey(0)
    ks = jax.random.split(key, 10)

    def init_linear(kw, kb, out_dim, in_dim):
        w = jax.random.normal(kw, (out_dim, in_dim), jnp.float32) * 0.02
        b = jax.random.normal(kb, (out_dim,), jnp.float32) * 0.01
        return w, b

    wq, bq = init_linear(ks[0], ks[1], H, H)
    wk, bk = init_linear(ks[2], ks[3], H, H)
    wv, bv = init_linear(ks[4], ks[5], H, H)
    wo, bo = init_linear(ks[6], ks[7], H, H)

    raw_params = {
        "num_heads": N,
        "wq": wq, "bq": bq,
        "wk": wk, "bk": bk,
        "wv": wv, "bv": bv,
        "wo": wo, "bo": bo,
        # module defaults are beta=0, gamma=1; nontrivial values exercise ConsMax
        "beta": jnp.array([0.1], dtype=jnp.float32),
        "gamma": jnp.array([1.3], dtype=jnp.float32),
    }

    hidden_states = jax.random.normal(ks[8], (B, S, H), jnp.float32)
    mask = jnp.ones((B, S), jnp.float32).at[:, -2:].set(0.0)

    ref = reference_forward(raw_params, hidden_states, attention_mask=None)
    ref_m = reference_forward(raw_params, hidden_states, attention_mask=mask)

    # ---- f32 compute path (exact module semantics) ----
    prepped = prepare_params(raw_params, compute_dtype=jnp.float32)

    out = jax.block_until_ready(
        consmax_attention_forward(prepped, hidden_states, attention_mask=None))
    assert out.shape == (B, S, H)
    assert jnp.allclose(out, ref, atol=1e-3, rtol=1e-3), "f32 mismatch (no mask)"

    out_m = jax.block_until_ready(
        consmax_attention_forward(prepped, hidden_states, attention_mask=mask))
    assert jnp.allclose(out_m, ref_m, atol=1e-3, rtol=1e-3), "f32 mismatch (mask)"

    # ---- bf16 MXU-operand path (f32 accumulation): production setting v6e/v7x ----
    prepped_bf16 = prepare_params(raw_params, compute_dtype=jnp.bfloat16)
    out_b = jax.block_until_ready(
        consmax_attention_forward(prepped_bf16, hidden_states, attention_mask=mask))
    assert out_b.shape == (B, S, H)
    assert jnp.all(jnp.isfinite(out_b))
    assert jnp.allclose(out_b, ref_m, atol=2e-2, rtol=2e-2), "bf16 mismatch (mask)"

    print("KERNEL_OK")
</pallas_src>

<mosaic_0001>
module attributes {stable_mosaic.version = 11 : i64} {
  func.func @_linear_kernel(%arg0: i32, %arg1: i32, %arg2: i32, %arg3: memref<16x32xf32, #tpu.memory_space<vmem>>, %arg4: memref<32x32xf32, #tpu.memory_space<vmem>>, %arg5: memref<1x32xf32, #tpu.memory_space<vmem>>, %arg6: memref<16x32xf32, #tpu.memory_space<vmem>>, %arg7: memref<16x32xf32, #tpu.memory_space<vmem>>) attributes {dimension_semantics = [#tpu.dimension_semantics<parallel>, #tpu.dimension_semantics<parallel>, #tpu.dimension_semantics<arbitrary>], iteration_bounds = array<i64: 1, 1, 1>, scalar_prefetch = 0 : i64, scratch_operands = 1 : i64, tpu.core_type = #tpu.core_type<tc>, window_params = [{transform_indices = @transform_0, window_bounds = array<i64: 16, 32>}, {transform_indices = @transform_1, window_bounds = array<i64: 32, 32>}, {transform_indices = @transform_2, window_bounds = array<i64: 1, 32>}, {transform_indices = @transform_3, window_bounds = array<i64: 16, 32>}]} {
    %c0_i32 = arith.constant 0 : i32
    %0 = arith.cmpi eq, %arg2, %c0_i32 : i32
    %1 = arith.extui %0 : i1 to i32
    %c0_i32_0 = arith.constant 0 : i32
    %2 = arith.cmpi ne, %1, %c0_i32_0 : i32
    scf.if %2 {
      %cst_10 = arith.constant 0.000000e+00 : f32
      %12 = vector.broadcast %cst_10 : f32 to vector<16x32xf32>
      %c0_11 = arith.constant 0 : index
      %c0_12 = arith.constant 0 : index
      %13 = vector.load %arg7[%c0_11, %c0_12] : memref<16x32xf32, #tpu.memory_space<vmem>>, vector<16x32xf32>
      tpu.vector_store %arg7[%c0_11, %c0_12], %12 {strides = array<i32>} : memref<16x32xf32, #tpu.memory_space<vmem>>, vector<16x32xf32>,
    } else {
    }
    %c0 = arith.constant 0 : index
    %c0_1 = arith.constant 0 : index
    %3 = vector.load %arg7[%c0, %c0_1] : memref<16x32xf32, #tpu.memory_space<vmem>>, vector<16x32xf32>
    %c0_2 = arith.constant 0 : index
    %c0_3 = arith.constant 0 : index
    %4 = vector.load %arg3[%c0_2, %c0_3] : memref<16x32xf32, #tpu.memory_space<vmem>>, vector<16x32xf32>
    %c0_4 = arith.constant 0 : index
    %c0_5 = arith.constant 0 : index
    %5 = vector.load %arg4[%c0_4, %c0_5] : memref<32x32xf32, #tpu.memory_space<vmem>>, vector<32x32xf32>
    %cst = arith.constant dense<0.000000e+00> : vector<16x32xf32>
    %6 = tpu.matmul %4, %5, %cst {dimension_numbers = #tpu.dot_dimension_numbers<[1], [0], [0], [1], [0, 0, 1, 1], [], []>} : vector<16x32xf32>, vector<32x32xf32>, vector<16x32xf32> -> vector<16x32xf32>
    %7 = arith.addf %3, %6 : vector<16x32xf32>
    %c0_6 = arith.constant 0 : index
    %c0_7 = arith.constant 0 : index
    %8 = vector.load %arg7[%c0_6, %c0_7] : memref<16x32xf32, #tpu.memory_space<vmem>>, vector<16x32xf32>
    tpu.vector_store %arg7[%c0_6, %c0_7], %7 {strides = array<i32>} : memref<16x32xf32, #tpu.memory_space<vmem>>, vector<16x32xf32>,
    %c0_i32_8 = arith.constant 0 : i32
    %9 = arith.cmpi eq, %arg2, %c0_i32_8 : i32
    %10 = arith.extui %9 : i1 to i32
    %c0_i32_9 = arith.constant 0 : i32
    %11 = arith.cmpi ne, %10, %c0_i32_9 : i32
    scf.if %11 {
      %c0_10 = arith.constant 0 : index
      %c0_11 = arith.constant 0 : index
      %12 = vector.load %arg7[%c0_10, %c0_11] : memref<16x32xf32, #tpu.memory_space<vmem>>, vector<16x32xf32>
      %c0_12 = arith.constant 0 : index
      %c0_13 = arith.constant 0 : index
      %13 = vector.load %arg5[%c0_12, %c0_13] : memref<1x32xf32, #tpu.memory_space<vmem>>, vector<1x32xf32>
      %14 = vector.broadcast %13 : vector<1x32xf32> to vector<16x32xf32>
      %15 = arith.addf %12, %14 : vector<16x32xf32>
      %c0_14 = arith.constant 0 : index
      %c0_15 = arith.constant 0 : index
      %16 = vector.load %arg6[%c0_14, %c0_15] : memref<16x32xf32, #tpu.memory_space<vmem>>, vector<16x32xf32>
      tpu.vector_store %arg6[%c0_14, %c0_15], %15 {strides = array<i32>} : memref<16x32xf32, #tpu.memory_space<vmem>>, vector<16x32xf32>,
    } else {
    }
    return
  }
  func.func @transform_0(%arg0: i32, %arg1: i32, %arg2: i32) -> (i32, i32) {
    %c0_i32 = arith.constant 0 : i32
    return %arg0, %arg2 : i32, i32
  }
  func.func @transform_1(%arg0: i32, %arg1: i32, %arg2: i32) -> (i32, i32) {
    %c0_i32 = arith.constant 0 : i32
    return %arg2, %arg1 : i32, i32
  }
  func.func @transform_2(%arg0: i32, %arg1: i32, %arg2: i32) -> (i32, i32) {
    %c0_i32 = arith.constant 0 : i32
    %c0_i32_0 = arith.constant 0 : i32
    return %c0_i32, %arg1 : i32, i32
  }
  func.func @transform_3(%arg0: i32, %arg1: i32, %arg2: i32) -> (i32, i32) {
    %c0_i32 = arith.constant 0 : i32
    return %arg0, %arg1 : i32, i32
  }
}

</mosaic_0001>

<llo_original>
// kernel: tpu_custom_call.1
$region0: #{tpu_custom_call.1}
  #allocation0 [shape = 'u32[]', space=smem, size = 0x4, offset = 0x4, fixed_abs, tag = 'smem constant byte address 0x4 - core index']
  #allocation1 [shape = 'u32[144,128]{1,0:T(1,128)}', space=vmem, size = 0x12000, scoped, tag = 'internal scratch']
  #allocation2 [shape = 'f32[16,32]{1,0:T(8,128)}', space=vmem, size = 0x2000, scoped, tag = 'scratch operand']
  %s0 = inlined_call_operand.hbm [shape: f32[16,32], index: 0, kind: input, shape index: {}]
  %s1 = inlined_call_operand.hbm [shape: f32[32,32], index: 1, kind: input, shape index: {}]
  %s2 = inlined_call_operand.vmem [shape: f32[1,32], index: 2, kind: input, shape index: {}]
  %s3 = inlined_call_operand.hbm [shape: f32[16,32], index: 3, kind: output, shape index: {}]
  %s4 = sld [smem:[#allocation0]]
  $region38: #{tpu_custom_call.1} parent=0
    _
  %s6 = ssub.s32 1, %s4
  %s7 = scalar_select 0, %s6, %s4
  $region1: #{tpu_custom_call.1} parent=0
    #allocation3 [shape = 'u8[8192]{0}', space=vmem, size = 0x2000, scoped, tag = 'input window, operand 0, single buffered']
    #allocation4 [shape = 's32[1]{0}', space=sflag, size = 0x4, scoped, tag = 'scoped memory for tpu_custom_call.1']
    #allocation5 [shape = 's32[1]{0}', space=sflag, size = 0x4, scoped, tag = 'scoped memory for tpu_custom_call.1']
    #allocation6 [shape = 'u8[16384]{0}', space=vmem, size = 0x4000, scoped, tag = 'input window, operand 1, single buffered']
    #allocation7 [shape = 's32[1]{0}', space=sflag, size = 0x4, scoped, tag = 'scoped memory for tpu_custom_call.1']
    #allocation8 [shape = 'u8[8192]{0}', space=vmem, size = 0x2000, scoped, tag = 'output window, operand 0, single buffered']
    %8 = vsyncpa [#allocation4], 0
    %9 = vsyncpa [#allocation7], 0
    %10 = vsyncpa [#allocation5], 0
    // Predicated region
    $region2: #{tpu_custom_call.1} parent=1 // pred_check
      _
    $region3: #{tpu_custom_call.1} parent=1 // pred_check_branch
      %12 = sbr.rel (0) target = $region5
    $region4: #{tpu_custom_call.1} parent=1 // pred_region
      %s14 = ssub.s32 256, 256
      %15 = vsyncadd [#allocation4], %s14
      %s16 = sshll.u32 [#allocation3], 4
      %s17 = int_to_ptr.vmem [resolvable:$true] %s16
      %22 = dma.hbm_to_vmem [thread:$0]  %s0, 256, %s17, [#allocation4], 128, 128, 8
    $region5: #{tpu_custom_call.1} parent=1 // pred_fallthru
      _
    // Predicated region
    $region6: #{tpu_custom_call.1} parent=1 // pred_check
      _
    $region7: #{tpu_custom_call.1} parent=1 // pred_check_branch
      %24 = sbr.rel (0) target = $region9
    $region8: #{tpu_custom_call.1} parent=1 // pred_region
      %s26 = ssub.s32 512, 512
      %27 = vsyncadd [#allocation7], %s26
      %s28 = sshll.u32 [#allocation6], 4
      %s29 = int_to_ptr.vmem [resolvable:$true] %s28
      %34 = dma.hbm_to_vmem [thread:$0]  %s1, 512, %s29, [#allocation7], 128, 128, 8
    $region9: #{tpu_custom_call.1} parent=1 // pred_fallthru
      _
    // Predicated region
    $region10: #{tpu_custom_call.1} parent=1 // pred_check
      _
    $region11: #{tpu_custom_call.1} parent=1 // pred_check_branch
      %36 = sbr.rel (0) target = $region13
    $region12: #{tpu_custom_call.1} parent=1 // pred_region
      _
    $region13: #{tpu_custom_call.1} parent=1 // pred_fallthru
      _
    // Predicated region
    $region14: #{tpu_custom_call.1} parent=1 // pred_check
      _
    $region15: #{tpu_custom_call.1} parent=1 // pred_check_branch
      %38 = sbr.rel (0) target = $region17
    $region16: #{tpu_custom_call.1} parent=1 // pred_region
      %39 = dma.done [#allocation4], 256
    $region17: #{tpu_custom_call.1} parent=1 // pred_fallthru
      _
    // Predicated region
    $region18: #{tpu_custom_call.1} parent=1 // pred_check
      _
    $region19: #{tpu_custom_call.1} parent=1 // pred_check_branch
      %41 = sbr.rel (0) target = $region21
    $region20: #{tpu_custom_call.1} parent=1 // pred_region
      %42 = dma.done [#allocation7], 512
    $region21: #{tpu_custom_call.1} parent=1 // pred_fallthru
      _
    %p43 = scmp.eq.s32.totalorder 0, 0
    // Predicated region
    $region22: #{tpu_custom_call.1} parent=1 // pred_check
      %p44 = pneg %p43
    $region23: #{tpu_custom_call.1} parent=1 // pred_check_branch
      %46 = sbr.rel (%p44) target = $region25
    $region24: #{tpu_custom_call.1} parent=1 // pred_region
      %vm47 = vcmask 261120
      %48 = vst.msk [vmem:[#allocation2] sm:$0xff] %vm47, 0.0
      %49 = vst.msk [vmem:[#allocation2 + $0x8] sm:$0xff] %vm47, 0.0
    $region25: #{tpu_custom_call.1} parent=1 // pred_fallthru
      _
    %v50 = vld [vmem:[#allocation2] sm:$0xff]
    %v51 = vld [vmem:[#allocation2 + $0x8] sm:$0xff]
    %v52 = vld [vmem:[#allocation3] sm:$0xff]
    %v53 = vld [vmem:[#allocation3 + $0x8] sm:$0xff]
    %v54 = vld [vmem:[#allocation6] sm:$0xff]
    %v55 = vld [vmem:[#allocation6 + $0x8] sm:$0xff]
    %v56 = vld [vmem:[#allocation6 + $0x10] sm:$0xff]
    %v57 = vld [vmem:[#allocation6 + $0x18] sm:$0xff]
    %vm58 = vcmask 261120
    %v60 = vsel %vm58, %v52, 0
    %v63 = vsel %vm58, %v53, 0
    %65 = vmatprep.subr.mxu0 0.0
    %66 = vmatpush1.msra.mxu0 0.0
    %67 = vmatprep.subr.mxu0 0.0
    %68 = vmatpush1.msra.mxu0 0.0
    %69 = vmatprep.subr.mxu0 0.0
    %70 = vmatpush1.msra.mxu0 0.0
    %71 = vmatprep.subr.mxu0 0.0
    %72 = vmatpush1.msra.mxu0 0.0
    %73 = vmatprep.subr.mxu0 0.0
    %74 = vmatpush1.msra.mxu0 0.0
    %75 = vmatprep.subr.mxu0 0.0
    %76 = vmatpush1.msra.mxu0 0.0
    %77 = vmatprep.subr.mxu0 0.0
    %78 = vmatpush1.msra.mxu0 0.0
    %79 = vmatprep.subr.mxu0 0.0
    %80 = vmatpush1.msra.mxu0 0.0
    %81 = vmatprep.subr.mxu0 0.0
    %82 = vmatpush1.msra.mxu0 0.0
    %83 = vmatprep.subr.mxu0 0.0
    %84 = vmatpush1.msra.mxu0 0.0
    %85 = vmatprep.subr.mxu0 0.0
    %86 = vmatpush1.msra.mxu0 0.0
    %87 = vmatprep.subr.mxu0 0.0
    %88 = vmatpush1.msra.mxu0 0.0
    %89 = vmatprep.subr.mxu0 0.0
    %90 = vmatpush1.msra.mxu0 %v57
    %91 = vmatprep.subr.mxu0 0.0
    %92 = vmatpush1.msra.mxu0 %v56
    %93 = vmatprep.subr.mxu0 0.0
    %94 = vmatpush1.msra.mxu0 %v55
    %95 = vmatprep.subr.mxu0 0.0
    %96 = vmatpush1.msra.mxu0 %v54
    %97 = vmatprep.subr.mxu0 0.0
    %98 = vmatpush2.msra.mxu0 0.0
    %99 = vmatprep.subr.mxu0 0.0
    %100 = vmatpush2.msra.mxu0 0.0
    %101 = vmatprep.subr.mxu0 0.0
    %102 = vmatpush2.msra.mxu0 0.0
    %103 = vmatprep.subr.mxu0 0.0
    %104 = vmatpush2.msra.mxu0 0.0
    %105 = vmatprep.subr.mxu0 0.0
    %106 = vmatpush2.msra.mxu0 0.0
    %107 = vmatprep.subr.mxu0 0.0
    %108 = vmatpush2.msra.mxu0 0.0
    %109 = vmatprep.subr.mxu0 0.0
    %110 = vmatpush2.msra.mxu0 0.0
    %111 = vmatprep.subr.mxu0 0.0
    %112 = vmatpush2.msra.mxu0 0.0
    %113 = vmatprep.subr.mxu0 0.0
    %114 = vmatpush2.msra.mxu0 0.0
    %115 = vmatprep.subr.mxu0 0.0
    %116 = vmatpush2.msra.mxu0 0.0
    %117 = vmatprep.subr.mxu0 0.0
    %118 = vmatpush2.msra.mxu0 0.0
    %119 = vmatprep.subr.mxu0 0.0
    %120 = vmatpush2.msra.mxu0 0.0
    %121 = vmatprep.subr.mxu0 0.0
    %122 = vmatpush2.msra.mxu0 0.0
    %123 = vmatprep.subr.mxu0 0.0
    %124 = vmatpush2.msra.mxu0 0.0
    %125 = vmatprep.subr.mxu0 0.0
    %126 = vmatpush2.msra.mxu0 0.0
    %127 = vmatprep.subr.mxu0 0.0
    %128 = vmatpush2.msra.mxu0 0.0
    %129 = vmatprep.mubr.f32.mxu0 0.0
    %130 = vmatmul.mubr.f32.gmra.mxu0 %v60
    %v131 = vpop.f32.mrf.mxu0
    %v132 = vadd.f32 0.0, %v131
    %v133 = vpop.f32.mrf.mxu0
    %134 = vmatprep.mubr.f32.mxu0 0.0
    %135 = vmatmul.mubr.f32.gmra.mxu0 %v63
    %v136 = vpop.f32.mrf.mxu0
    %v137 = vadd.f32 0.0, %v136
    %v138 = vpop.f32.mrf.mxu0
    %139 = vdwg.mxu0
    %v140 = vadd.f32 %v50, %v132
    %v141 = vadd.f32 %v51, %v137
    %142 = vst.msk [vmem:[#allocation2] sm:$0xff] %vm58, %v140
    %143 = vst.msk [vmem:[#allocation2 + $0x8] sm:$0xff] %vm58, %v141
    // Predicated region
    $region26: #{tpu_custom_call.1} parent=1 // pred_check
      %p144 = pneg %p43
    $region27: #{tpu_custom_call.1} parent=1 // pred_check_branch
      %146 = sbr.rel (%p144) target = $region29
    $region28: #{tpu_custom_call.1} parent=1 // pred_region
      %v147 = vld [vmem:[#allocation2] sm:$0xff]
      %v148 = vld [vmem:[#allocation2 + $0x8] sm:$0xff]
      %v149 = vld [vmem:[%s2] sm:$0x1]
      %v151 = vlaneseq
      %v152 = vshrl.u32 %v151, 7
      %v153 = vsub.s32 0, %v152
      %v154 = vrot.slane %v149, %v153
      %v156 = vadd.f32 %v147, %v154
      %v157 = vadd.f32 %v148, %v154
      %158 = vst.msk [vmem:[#allocation8] sm:$0xff] %vm58, %v156
      %159 = vst.msk [vmem:[#allocation8 + $0x8] sm:$0xff] %vm58, %v157
    $region29: #{tpu_custom_call.1} parent=1 // pred_fallthru
      _
    // Predicated region
    $region30: #{tpu_custom_call.1} parent=1 // pred_check
      _
    $region31: #{tpu_custom_call.1} parent=1 // pred_check_branch
      %161 = sbr.rel (0) target = $region33
    $region32: #{tpu_custom_call.1} parent=1 // pred_region
      %s163 = ssub.s32 256, 256
      %164 = vsyncadd [#allocation5], %s163
      %s165 = sshll.u32 [#allocation8], 4
      %s166 = int_to_ptr.vmem [resolvable:$true] %s165
      %171 = dma.vmem_to_hbm [thread:$0]  %s166, 256, %s3, [#allocation5], 128, 128, 8
    $region33: #{tpu_custom_call.1} parent=1 // pred_fallthru
      _
    // Predicated region
    $region34: #{tpu_custom_call.1} parent=1 // pred_check
      _
    $region35: #{tpu_custom_call.1} parent=1 // pred_check_branch
      %173 = sbr.rel (0) target = $region37
    $region36: #{tpu_custom_call.1} parent=1 // pred_region
      %174 = dma.done [#allocation5], 256
    $region37: #{tpu_custom_call.1} parent=1 // pred_fallthru
      _
    %175 = vsyncpa [#allocation4], 1
    %176 = vsyncpa [#allocation7], 1
    %177 = vsyncpa [#allocation5], 1

</llo_original>
